<compile_context>
chip_gen: v7x
topology: tpu7x:2x2x1
jax: 0.10.0
libtpu: 0.0.40
codegen_flags: <defaults>
</compile_context>

<pallas_src>
import functools

import jax
import jax.numpy as jnp
from jax.experimental import pallas as pl
from jax.experimental.pallas import tpu as pltpu


def _fused_gate_conv_bn_kernel(g_ref, x_ref, w_ref, gamma_ref, beta_ref,
                               o_ref, sum_ref, sq_ref, *, inv_m, eps):
    """One grid step == one batch image.

    step n:   gate = sigmoid(g[n])            (1, Cin)
              y_n  = (x[n] * gate) @ w        (HW, Cout)  bf16 MXU, f32 accumulate
              o[n] = y_n                      (output block is VMEM-resident)
              accumulate per-channel sum / sum-of-squares
    last n:   fold training-mode BN (biased variance) into scale/bias and apply it
              in place on the resident output.
    """
    n = pl.program_id(0)

    @pl.when(n == 0)
    def _():
        sum_ref[...] = jnp.zeros_like(sum_ref)
        sq_ref[...] = jnp.zeros_like(sq_ref)

    gate = jax.nn.sigmoid(g_ref[0])                                # (1, Cin) f32
    xg = (x_ref[0] * gate).astype(w_ref.dtype)                     # (HW, Cin) bf16
    y = jnp.dot(xg, w_ref[...], preferred_element_type=jnp.float32)  # (HW, Cout) f32
    o_ref[n] = y

    # Per-channel partial stats: two independent 2-D sublane reductions
    # (no concatenate, no (2, Cout) relayout).
    sum_ref[...] += jnp.sum(y, axis=0, keepdims=True)
    sq_ref[...] += jnp.sum(y * y, axis=0, keepdims=True)

    @pl.when(n == pl.num_programs(0) - 1)
    def _():
        mean = sum_ref[...] * inv_m                                # (1, Cout)
        # TODO(synk): E[y^2]-E[y]^2 can cancel for very large-magnitude activations;
        # acceptable at these scales (f32 accumulation, |y| ~ O(1)).
        var = sq_ref[...] * inv_m - mean * mean                    # biased (training BN)
        scale = gamma_ref[...] * jax.lax.rsqrt(var + eps)          # (1, Cout)
        bias = beta_ref[...] - mean * scale                        # (1, Cout)
        o_ref[...] = o_ref[...] * scale + bias                     # (N, HW, Cout)


def sigmoid_mul_conv_bn(x463, x467, w, gamma, beta, eps=1e-5):
    N, Cin, H, W = x463.shape
    Cout = w.shape[0]
    HW = H * W
    M = N * HW

    # Layout glue only (no compute): NCHW -> channels-last (N, HW, Cin).
    # TODO(synk): if callers can provide NHWC, these wrapper transposes disappear.
    xf = jnp.transpose(x463, (0, 2, 3, 1)).reshape(N, HW, Cin).astype(jnp.float32)
    gf = x467.reshape(N, 1, Cin).astype(jnp.float32)               # un-broadcast gate
    # 1x1 conv == matmul; weight stored/DMA'd as bf16 (dominant HBM read halved).
    w2 = jnp.transpose(w.reshape(Cout, Cin)).astype(jnp.bfloat16)  # (Cin, Cout)
    gamma2 = gamma.reshape(1, Cout).astype(jnp.float32)
    beta2 = beta.reshape(1, Cout).astype(jnp.float32)

    kernel = functools.partial(_fused_gate_conv_bn_kernel, inv_m=1.0 / M, eps=eps)

    out = pl.pallas_call(
        kernel,
        out_shape=jax.ShapeDtypeStruct((N, HW, Cout), jnp.float32),
        grid_spec=pltpu.PrefetchScalarGridSpec(
            num_scalar_prefetch=0,
            grid=(N,),
            in_specs=[
                pl.BlockSpec((1, 1, Cin), lambda n: (n, 0, 0)),    # gate (un-broadcast)
                pl.BlockSpec((1, HW, Cin), lambda n: (n, 0, 0)),   # activations
                pl.BlockSpec((Cin, Cout), lambda n: (0, 0)),       # weight (grid-invariant)
                pl.BlockSpec((1, Cout), lambda n: (0, 0)),         # gamma
                pl.BlockSpec((1, Cout), lambda n: (0, 0)),         # beta
            ],
            # Constant block index -> the whole result stays resident in VMEM across the
            # grid and is written back to HBM exactly once after the final step.
            out_specs=pl.BlockSpec((N, HW, Cout), lambda n: (0, 0, 0)),
            scratch_shapes=[
                pltpu.VMEM((1, Cout), jnp.float32),   # per-channel sum
                pltpu.VMEM((1, Cout), jnp.float32),   # per-channel sum of squares
            ],
        ),
        compiler_params=pltpu.CompilerParams(
            # Resident output + final BN step require sequential grid execution.
            dimension_semantics=("arbitrary",),
        ),
    )(gf, xf, w2, gamma2, beta2)

    # Back to NCHW.
    return out.reshape(N, H, W, Cout).transpose(0, 3, 1, 2)


def _reference(x463, x467, w, gamma, beta, eps=1e-5):
    """Pure-JAX f32 reference matching the PyTorch forward (training-mode BN)."""
    gated = x463 * jax.nn.sigmoid(x467)
    Cout, Cin = w.shape[0], w.shape[1]
    y = jnp.einsum('nchw,oc->nohw', gated, w.reshape(Cout, Cin))
    mean = jnp.mean(y, axis=(0, 2, 3), keepdims=True)
    var = jnp.mean((y - mean) ** 2, axis=(0, 2, 3), keepdims=True)  # biased
    return (y - mean) / jnp.sqrt(var + eps) * gamma.reshape(1, -1, 1, 1) \
        + beta.reshape(1, -1, 1, 1)


if __name__ == "__main__":
    # Small shapes consistent with the module (orig: N=1, Cin=2688, Cout=448, H=W=7).
    # Keep the awkward HW = 7*7 = 49 to exercise the non-8-aligned spatial extent.
    N, Cin, Cout, H, W = 2, 64, 32, 7, 7

    key = jax.random.PRNGKey(0)
    k1, k2, k3 = jax.random.split(key, 3)
    x463 = jax.random.normal(k1, (N, Cin, H, W), dtype=jnp.float32)
    x467 = jax.random.normal(k2, (N, Cin, 1, 1), dtype=jnp.float32)

    # Deterministic parameter init (Conv2d weight, no bias; BN affine defaults).
    w = jax.random.normal(k3, (Cout, Cin, 1, 1), dtype=jnp.float32) * 0.05
    gamma = jnp.ones((Cout,), dtype=jnp.float32)   # PyTorch BatchNorm2d default
    beta = jnp.zeros((Cout,), dtype=jnp.float32)

    out = sigmoid_mul_conv_bn(x463, x467, w, gamma, beta)
    out = jax.block_until_ready(out)

    ref = _reference(x463, x467, w, gamma, beta)
    assert out.shape == (N, Cout, H, W)
    max_err = float(jnp.max(jnp.abs(out - ref)))
    # Tolerance covers the bf16 matmul operands (f32 accumulation & f32 BN math).
    assert jnp.allclose(out, ref, rtol=3e-2, atol=3e-2), max_err

    print("KERNEL_OK")
</pallas_src>

<mosaic_0001>
module attributes {stable_mosaic.version = 11 : i64} {
  func.func @_fused_gate_conv_bn_kernel(%arg0: i32, %arg1: memref<1x1x64xf32, #tpu.memory_space<vmem>>, %arg2: memref<1x49x64xf32, #tpu.memory_space<vmem>>, %arg3: memref<64x32xbf16, #tpu.memory_space<vmem>>, %arg4: memref<1x32xf32, #tpu.memory_space<vmem>>, %arg5: memref<1x32xf32, #tpu.memory_space<vmem>>, %arg6: memref<2x49x32xf32, #tpu.memory_space<vmem>>, %arg7: memref<1x32xf32, #tpu.memory_space<vmem>>, %arg8: memref<1x32xf32, #tpu.memory_space<vmem>>) attributes {dimension_semantics = [#tpu.dimension_semantics<arbitrary>], iteration_bounds = array<i64: 2>, scalar_prefetch = 0 : i64, scratch_operands = 2 : i64, tpu.core_type = #tpu.core_type<tc>, window_params = [{transform_indices = @transform_0, window_bounds = array<i64: 1, 1, 64>}, {transform_indices = @transform_1, window_bounds = array<i64: 1, 49, 64>}, {pipeline_mode = #tpu.pipeline_mode<synchronous>, transform_indices = @transform_2, window_bounds = array<i64: 64, 32>}, {pipeline_mode = #tpu.pipeline_mode<synchronous>, transform_indices = @transform_3, window_bounds = array<i64: 1, 32>}, {pipeline_mode = #tpu.pipeline_mode<synchronous>, transform_indices = @transform_4, window_bounds = array<i64: 1, 32>}, {pipeline_mode = #tpu.pipeline_mode<synchronous>, transform_indices = @transform_5, window_bounds = array<i64: 2, 49, 32>}]} {
    %c0_i32 = arith.constant 0 : i32
    %0 = arith.cmpi eq, %arg0, %c0_i32 : i32
    %1 = arith.extui %0 : i1 to i32
    %c0_i32_0 = arith.constant 0 : i32
    %2 = arith.cmpi ne, %1, %c0_i32_0 : i32
    scf.if %2 {
      %cst_22 = arith.constant 0.000000e+00 : f32
      %35 = vector.broadcast %cst_22 : f32 to vector<1x32xf32>
      %c0_23 = arith.constant 0 : index
      %c0_24 = arith.constant 0 : index
      %36 = vector.load %arg7[%c0_23, %c0_24] : memref<1x32xf32, #tpu.memory_space<vmem>>, vector<1x32xf32>
      tpu.vector_store %arg7[%c0_23, %c0_24], %35 {strides = array<i32>} : memref<1x32xf32, #tpu.memory_space<vmem>>, vector<1x32xf32>,
      %cst_25 = arith.constant 0.000000e+00 : f32
      %37 = vector.broadcast %cst_25 : f32 to vector<1x32xf32>
      %c0_26 = arith.constant 0 : index
      %c0_27 = arith.constant 0 : index
      %38 = vector.load %arg8[%c0_26, %c0_27] : memref<1x32xf32, #tpu.memory_space<vmem>>, vector<1x32xf32>
      tpu.vector_store %arg8[%c0_26, %c0_27], %37 {strides = array<i32>} : memref<1x32xf32, #tpu.memory_space<vmem>>, vector<1x32xf32>,
    } else {
    }
    %c0 = arith.constant 0 : index
    %c0_1 = arith.constant 0 : index
    %c0_2 = arith.constant 0 : index
    %3 = vector.load %arg1[%c0, %c0_1, %c0_2] : memref<1x1x64xf32, #tpu.memory_space<vmem>>, vector<1x1x64xf32>
    %4 = vector.shape_cast %3 : vector<1x1x64xf32> to vector<1x64xf32>
    %5 = arith.negf %4 : vector<1x64xf32>
    %6 = math.exp %5 : vector<1x64xf32>
    %cst = arith.constant 1.000000e+00 : f32
    %7 = vector.broadcast %cst : f32 to vector<1x64xf32>
    %8 = arith.addf %7, %6 : vector<1x64xf32>
    %9 = arith.divf %7, %8 : vector<1x64xf32>
    %c0_3 = arith.constant 0 : index
    %c0_4 = arith.constant 0 : index
    %c0_5 = arith.constant 0 : index
    %10 = vector.load %arg2[%c0_3, %c0_4, %c0_5] : memref<1x49x64xf32, #tpu.memory_space<vmem>>, vector<1x49x64xf32>
    %11 = vector.shape_cast %10 : vector<1x49x64xf32> to vector<49x64xf32>
    %12 = vector.broadcast %9 : vector<1x64xf32> to vector<49x64xf32>
    %13 = arith.mulf %11, %12 : vector<49x64xf32>
    %14 = arith.truncf %13 : vector<49x64xf32> to vector<49x64xbf16>
    %c0_6 = arith.constant 0 : index
    %c0_7 = arith.constant 0 : index
    %15 = vector.load %arg3[%c0_6, %c0_7] : memref<64x32xbf16, #tpu.memory_space<vmem>>, vector<64x32xbf16>
    %cst_8 = arith.constant dense<0.000000e+00> : vector<49x32xf32>
    %16 = tpu.matmul %14, %15, %cst_8 {dimension_numbers = #tpu.dot_dimension_numbers<[1], [0], [0], [1], [0, 0, 1, 1], [], []>} : vector<49x64xbf16>, vector<64x32xbf16>, vector<49x32xf32> -> vector<49x32xf32>
    %17 = arith.index_cast %arg0 : i32 to index
    %c0_9 = arith.constant 0 : index
    %c0_10 = arith.constant 0 : index
    %18 = vector.load %arg6[%17, %c0_9, %c0_10] : memref<2x49x32xf32, #tpu.memory_space<vmem>>, vector<1x49x32xf32>
    %19 = vector.shape_cast %18 : vector<1x49x32xf32> to vector<49x32xf32>
    %20 = vector.shape_cast %16 : vector<49x32xf32> to vector<1x49x32xf32>
    tpu.vector_store %arg6[%17, %c0_9, %c0_10], %20 {strides = array<i32>} : memref<2x49x32xf32, #tpu.memory_space<vmem>>, vector<1x49x32xf32>,
    %c0_11 = arith.constant 0 : index
    %c0_12 = arith.constant 0 : index
    %21 = vector.load %arg7[%c0_11, %c0_12] : memref<1x32xf32, #tpu.memory_space<vmem>>, vector<1x32xf32>
    %cst_13 = arith.constant dense<0.000000e+00> : vector<32xf32>
    %22 = vector.multi_reduction <add>, %16, %cst_13 [0] : vector<49x32xf32> to vector<32xf32>
    %23 = vector.shape_cast %22 : vector<32xf32> to vector<1x32xf32>
    %24 = arith.addf %21, %23 : vector<1x32xf32>
    %c0_14 = arith.constant 0 : index
    %c0_15 = arith.constant 0 : index
    %25 = vector.load %arg7[%c0_14, %c0_15] : memref<1x32xf32, #tpu.memory_space<vmem>>, vector<1x32xf32>
    tpu.vector_store %arg7[%c0_14, %c0_15], %24 {strides = array<i32>} : memref<1x32xf32, #tpu.memory_space<vmem>>, vector<1x32xf32>,
    %c0_16 = arith.constant 0 : index
    %c0_17 = arith.constant 0 : index
    %26 = vector.load %arg8[%c0_16, %c0_17] : memref<1x32xf32, #tpu.memory_space<vmem>>, vector<1x32xf32>
    %27 = arith.mulf %16, %16 : vector<49x32xf32>
    %cst_18 = arith.constant dense<0.000000e+00> : vector<32xf32>
    %28 = vector.multi_reduction <add>, %27, %cst_18 [0] : vector<49x32xf32> to vector<32xf32>
    %29 = vector.shape_cast %28 : vector<32xf32> to vector<1x32xf32>
    %30 = arith.addf %26, %29 : vector<1x32xf32>
    %c0_19 = arith.constant 0 : index
    %c0_20 = arith.constant 0 : index
    %31 = vector.load %arg8[%c0_19, %c0_20] : memref<1x32xf32, #tpu.memory_space<vmem>>, vector<1x32xf32>
    tpu.vector_store %arg8[%c0_19, %c0_20], %30 {strides = array<i32>} : memref<1x32xf32, #tpu.memory_space<vmem>>, vector<1x32xf32>,
    %c1_i32 = arith.constant 1 : i32
    %32 = arith.cmpi eq, %arg0, %c1_i32 : i32
    %33 = arith.extui %32 : i1 to i32
    %c0_i32_21 = arith.constant 0 : i32
    %34 = arith.cmpi ne, %33, %c0_i32_21 : i32
    scf.if %34 {
      %c0_22 = arith.constant 0 : index
      %c0_23 = arith.constant 0 : index
      %35 = vector.load %arg7[%c0_22, %c0_23] : memref<1x32xf32, #tpu.memory_space<vmem>>, vector<1x32xf32>
      %cst_24 = arith.constant 0.0102040814 : f32
      %36 = vector.broadcast %cst_24 : f32 to vector<1x32xf32>
      %37 = arith.mulf %35, %36 : vector<1x32xf32>
      %c0_25 = arith.constant 0 : index
      %c0_26 = arith.constant 0 : index
      %38 = vector.load %arg8[%c0_25, %c0_26] : memref<1x32xf32, #tpu.memory_space<vmem>>, vector<1x32xf32>
      %cst_27 = arith.constant 0.0102040814 : f32
      %39 = vector.broadcast %cst_27 : f32 to vector<1x32xf32>
      %40 = arith.mulf %38, %39 : vector<1x32xf32>
      %41 = arith.mulf %37, %37 : vector<1x32xf32>
      %42 = arith.subf %40, %41 : vector<1x32xf32>
      %c0_28 = arith.constant 0 : index
      %c0_29 = arith.constant 0 : index
      %43 = vector.load %arg4[%c0_28, %c0_29] : memref<1x32xf32, #tpu.memory_space<vmem>>, vector<1x32xf32>
      %cst_30 = arith.constant 9.99999974E-6 : f32
      %44 = vector.broadcast %cst_30 : f32 to vector<1x32xf32>
      %45 = arith.addf %42, %44 : vector<1x32xf32>
      %46 = math.rsqrt %45 : vector<1x32xf32>
      %47 = arith.mulf %43, %46 : vector<1x32xf32>
      %c0_31 = arith.constant 0 : index
      %c0_32 = arith.constant 0 : index
      %48 = vector.load %arg5[%c0_31, %c0_32] : memref<1x32xf32, #tpu.memory_space<vmem>>, vector<1x32xf32>
      %49 = arith.mulf %37, %47 : vector<1x32xf32>
      %50 = arith.subf %48, %49 : vector<1x32xf32>
      %c0_33 = arith.constant 0 : index
      %c0_34 = arith.constant 0 : index
      %c0_35 = arith.constant 0 : index
      %51 = vector.load %arg6[%c0_33, %c0_34, %c0_35] : memref<2x49x32xf32, #tpu.memory_space<vmem>>, vector<2x49x32xf32>
      %52 = vector.shape_cast %47 : vector<1x32xf32> to vector<1x1x32xf32>
      %53 = vector.broadcast %52 : vector<1x1x32xf32> to vector<2x49x32xf32>
      %54 = arith.mulf %51, %53 : vector<2x49x32xf32>
      %55 = vector.shape_cast %50 : vector<1x32xf32> to vector<1x1x32xf32>
      %56 = vector.broadcast %55 : vector<1x1x32xf32> to vector<2x49x32xf32>
      %57 = arith.addf %54, %56 : vector<2x49x32xf32>
      %c0_36 = arith.constant 0 : index
      %c0_37 = arith.constant 0 : index
      %c0_38 = arith.constant 0 : index
      %58 = vector.load %arg6[%c0_36, %c0_37, %c0_38] : memref<2x49x32xf32, #tpu.memory_space<vmem>>, vector<2x49x32xf32>
      tpu.vector_store %arg6[%c0_36, %c0_37, %c0_38], %57 {strides = array<i32>} : memref<2x49x32xf32, #tpu.memory_space<vmem>>, vector<2x49x32xf32>,
    } else {
    }
    return
  }
  func.func @transform_0(%arg0: i32) -> (i32, i32, i32) {
    %c0_i32 = arith.constant 0 : i32
    %c0_i32_0 = arith.constant 0 : i32
    %c0_i32_1 = arith.constant 0 : i32
    return %arg0, %c0_i32, %c0_i32_0 : i32, i32, i32
  }
  func.func @transform_1(%arg0: i32) -> (i32, i32, i32) {
    %c0_i32 = arith.constant 0 : i32
    %c0_i32_0 = arith.constant 0 : i32
    %c0_i32_1 = arith.constant 0 : i32
    return %arg0, %c0_i32, %c0_i32_0 : i32, i32, i32
  }
  func.func @transform_2(%arg0: i32) -> (i32, i32) {
    %c0_i32 = arith.constant 0 : i32
    %c0_i32_0 = arith.constant 0 : i32
    %c0_i32_1 = arith.constant 0 : i32
    return %c0_i32, %c0_i32_0 : i32, i32
  }
  func.func @transform_3(%arg0: i32) -> (i32, i32) {
    %c0_i32 = arith.constant 0 : i32
    %c0_i32_0 = arith.constant 0 : i32
    %c0_i32_1 = arith.constant 0 : i32
    return %c0_i32, %c0_i32_0 : i32, i32
  }
  func.func @transform_4(%arg0: i32) -> (i32, i32) {
    %c0_i32 = arith.constant 0 : i32
    %c0_i32_0 = arith.constant 0 : i32
    %c0_i32_1 = arith.constant 0 : i32
    return %c0_i32, %c0_i32_0 : i32, i32
  }
  func.func @transform_5(%arg0: i32) -> (i32, i32, i32) {
    %c0_i32 = arith.constant 0 : i32
    %c0_i32_0 = arith.constant 0 : i32
    %c0_i32_1 = arith.constant 0 : i32
    %c0_i32_2 = arith.constant 0 : i32
    return %c0_i32, %c0_i32_0, %c0_i32_1 : i32, i32, i32
  }
}

</mosaic_0001>

<llo_original>
// kernel: tpu_custom_call.1
$region0: #{tpu_custom_call.1}
  #allocation0 [shape = 'u32[]', space=smem, size = 0x4, offset = 0x4, fixed_abs, tag = 'smem constant byte address 0x4 - core index']
  #allocation1 [shape = 'u32[144,128]{1,0:T(1,128)}', space=vmem, size = 0x12000, scoped, tag = 'internal scratch']
  #allocation2 [shape = 'f32[1,32]{1,0:T(1,128)}', space=vmem, size = 0x200, scoped, tag = 'scratch operand']
  #allocation3 [shape = 'f32[1,32]{1,0:T(1,128)}', space=vmem, size = 0x200, scoped, tag = 'scratch operand']
  %s0 = inlined_call_operand.vmem [shape: f32[2,1,64], index: 0, kind: input, shape index: {}]
  %s1 = inlined_call_operand.vmem [shape: f32[2,49,64], index: 1, kind: input, shape index: {}]
  %s2 = inlined_call_operand.vmem [shape: bf16[64,32], index: 2, kind: input, shape index: {}]
  %s3 = inlined_call_operand.vmem [shape: f32[1,32], index: 3, kind: input, shape index: {}]
  %s4 = inlined_call_operand.vmem [shape: f32[1,32], index: 4, kind: input, shape index: {}]
  %s5 = inlined_call_operand.vmem [shape: f32[2,49,32], index: 5, kind: output, shape index: {}]
  %s6 = sld [smem:[#allocation0]]
  $region61: #{tpu_custom_call.1} parent=0
    _
  %s8 = ssub.s32 1, %s6
  %s9 = scalar_select 0, %s8, %s6
  loop: start=0, step=1, limit=4
  $region2: #{tpu_custom_call.1} parent=0 // loop_pre_header
    _
  $region3: #{tpu_custom_call.1} parent=0 // loop_header
    %s11 = sphi 0, %s15
    %p12 = scmp.ge.s32.totalorder %s11, 4
    %s21 = sphi 0, %s23
    %s24 = sphi 0, %s21
    %s25 = sphi 0, %s24
    %s41 = sphi 0, %s25
    %s47 = sphi 0, %s49
    %s50 = sphi 0, %s47
    %s51 = sphi 0, %s50
    %s67 = sphi 0, %s51
    %s71 = sphi 0, %s71
    %s73 = sphi 0, %s71
    %s74 = sphi 0, %s73
    %s88 = sphi 0, %s74
    %s92 = sphi 0, %s92
    %s94 = sphi 0, %s92
    %s95 = sphi 0, %s94
    %s109 = sphi 0, %s95
    %s113 = sphi 0, %s113
    %s115 = sphi 0, %s113
    %s116 = sphi 0, %s115
    %s130 = sphi 0, %s116
    %s134 = sphi 0, %s134
    %s136 = sphi 0, %s134
    %s137 = sphi 0, %s136
    %s151 = sphi 0, %s137
  $region4: #{tpu_custom_call.1} parent=0 // loop_header_branch
    %14 = sbr.rel (%p12) target = $region8
  $region5: #{tpu_custom_call.1} parent=0 // loop_body
    %s16 = ssub.s32 %s11, 1
    %s17 = ssub.s32 %s11, 2
    %s18 = sadd.s32 %s11, 1
    %s19 = ssub.s32 %s11, %s18
    %p20 = scmp.eq.s32.totalorder %s19, 0
    %s22 = sadd.s32 %s21, 1
    %s23 = scalar_select %p20, %s21, %s22
    %p26 = pneg %p20
    %p27 = scmp.eq.s32.totalorder %s11, 1
    %p28 = por %p26, %p27
    %p29 = scmp.ne.s32.totalorder %s21, %s24
    %p30 = scmp.eq.s32.totalorder %s11, 0
    %p31 = por %p29, %p30
    %p32 = scmp.ne.s32.totalorder %s21, %s24
    %p33 = scmp.eq.s32.totalorder %s16, 1
    %p34 = por %p32, %p33
    %p35 = scmp.ne.s32.totalorder %s24, %s25
    %p36 = scmp.eq.s32.totalorder %s16, 0
    %p37 = por %p35, %p36
    %p38 = scmp.ne.s32.totalorder %s24, %s25
    %p39 = scmp.eq.s32.totalorder %s17, 1
    %p40 = por %p38, %p39
    %p42 = scmp.ne.s32.totalorder %s25, %s41
    %p43 = scmp.eq.s32.totalorder %s17, 0
    %p44 = por %p42, %p43
    %s45 = ssub.s32 %s11, %s18
    %p46 = scmp.eq.s32.totalorder %s45, 0
    %s48 = sadd.s32 %s47, 1
    %s49 = scalar_select %p46, %s47, %s48
    %p52 = pneg %p46
    %p53 = scmp.eq.s32.totalorder %s11, 1
    %p54 = por %p52, %p53
    %p55 = scmp.ne.s32.totalorder %s47, %s50
    %p56 = scmp.eq.s32.totalorder %s11, 0
    %p57 = por %p55, %p56
    %p58 = scmp.ne.s32.totalorder %s47, %s50
    %p59 = scmp.eq.s32.totalorder %s16, 1
    %p60 = por %p58, %p59
    %p61 = scmp.ne.s32.totalorder %s50, %s51
    %p62 = scmp.eq.s32.totalorder %s16, 0
    %p63 = por %p61, %p62
    %p64 = scmp.ne.s32.totalorder %s50, %s51
    %p65 = scmp.eq.s32.totalorder %s17, 1
    %p66 = por %p64, %p65
    %p68 = scmp.ne.s32.totalorder %s51, %s67
    %p69 = scmp.eq.s32.totalorder %s17, 0
    %p70 = por %p68, %p69
    %s72 = sadd.s32 %s71, 1
    %p75 = scmp.eq.s32.totalorder %s11, 1
    %p76 = scmp.ne.s32.totalorder %s71, %s73
    %p77 = scmp.eq.s32.totalorder %s11, 0
    %p78 = por %p76, %p77
    %p79 = scmp.ne.s32.totalorder %s71, %s73
    %p80 = scmp.eq.s32.totalorder %s16, 1
    %p81 = por %p79, %p80
    %p82 = scmp.ne.s32.totalorder %s73, %s74
    %p83 = scmp.eq.s32.totalorder %s16, 0
    %p84 = por %p82, %p83
    %p85 = scmp.ne.s32.totalorder %s73, %s74
    %p86 = scmp.eq.s32.totalorder %s17, 1
    %p87 = por %p85, %p86
    %p89 = scmp.ne.s32.totalorder %s74, %s88
    %p90 = scmp.eq.s32.totalorder %s17, 0
    %p91 = por %p89, %p90
    %s93 = sadd.s32 %s92, 1
    %p96 = scmp.eq.s32.totalorder %s11, 1
    %p97 = scmp.ne.s32.totalorder %s92, %s94
    %p98 = scmp.eq.s32.totalorder %s11, 0
    %p99 = por %p97, %p98
    %p100 = scmp.ne.s32.totalorder %s92, %s94
    %p101 = scmp.eq.s32.totalorder %s16, 1
    %p102 = por %p100, %p101
    %p103 = scmp.ne.s32.totalorder %s94, %s95
    %p104 = scmp.eq.s32.totalorder %s16, 0
    %p105 = por %p103, %p104
    %p106 = scmp.ne.s32.totalorder %s94, %s95
    %p107 = scmp.eq.s32.totalorder %s17, 1
    %p108 = por %p106, %p107
    %p110 = scmp.ne.s32.totalorder %s95, %s109
    %p111 = scmp.eq.s32.totalorder %s17, 0
    %p112 = por %p110, %p111
    %s114 = sadd.s32 %s113, 1
    %p117 = scmp.eq.s32.totalorder %s11, 1
    %p118 = scmp.ne.s32.totalorder %s113, %s115
    %p119 = scmp.eq.s32.totalorder %s11, 0
    %p120 = por %p118, %p119
    %p121 = scmp.ne.s32.totalorder %s113, %s115
    %p122 = scmp.eq.s32.totalorder %s16, 1
    %p123 = por %p121, %p122
    %p124 = scmp.ne.s32.totalorder %s115, %s116
    %p125 = scmp.eq.s32.totalorder %s16, 0
    %p126 = por %p124, %p125
    %p127 = scmp.ne.s32.totalorder %s115, %s116
    %p128 = scmp.eq.s32.totalorder %s17, 1
    %p129 = por %p127, %p128
    %p131 = scmp.ne.s32.totalorder %s116, %s130
    %p132 = scmp.eq.s32.totalorder %s17, 0
    %p133 = por %p131, %p132
    %s135 = sadd.s32 %s134, 1
    %p138 = scmp.eq.s32.totalorder %s11, 1
    %p139 = scmp.ne.s32.totalorder %s134, %s136
    %p140 = scmp.eq.s32.totalorder %s11, 0
    %p141 = por %p139, %p140
    %p142 = scmp.ne.s32.totalorder %s134, %s136
    %p143 = scmp.eq.s32.totalorder %s16, 1
    %p144 = por %p142, %p143
    %p145 = scmp.ne.s32.totalorder %s136, %s137
    %p146 = scmp.eq.s32.totalorder %s16, 0
    %p147 = por %p145, %p146
    %p148 = scmp.ne.s32.totalorder %s136, %s137
    %p149 = scmp.eq.s32.totalorder %s17, 1
    %p150 = por %p148, %p149
    %p152 = scmp.ne.s32.totalorder %s137, %s151
    %p153 = scmp.eq.s32.totalorder %s17, 0
    %p154 = por %p152, %p153
    %p155 = scmp.le.s32.totalorder 1, %s11
    %p156 = scmp.lt.s32.totalorder %s11, 3
    %p157 = pnand %p155, %p156
    %p158 = pneg %p157
    // Predicated region
    $region9: #{tpu_custom_call.1} parent=5 // pred_check
      _
    $region10: #{tpu_custom_call.1} parent=5 // pred_check_branch
      %160 = sbr.rel (%p157) target = $region12
    $region11: #{tpu_custom_call.1} parent=5 // pred_region
      %s161 = ssub.s32 %s11, 1
      // Predicated region
      $region13: #{tpu_custom_call.1} parent=11 // pred_check
        %p162 = pneg %p84
      $region14: #{tpu_custom_call.1} parent=11 // pred_check_branch
        %164 = sbr.rel (%p162) target = $region16
      $region15: #{tpu_custom_call.1} parent=11 // pred_region
        _
      $region16: #{tpu_custom_call.1} parent=11 // pred_fallthru
        _
      // Predicated region
      $region17: #{tpu_custom_call.1} parent=11 // pred_check
        %p165 = pneg %p105
      $region18: #{tpu_custom_call.1} parent=11 // pred_check_branch
        %167 = sbr.rel (%p165) target = $region20
      $region19: #{tpu_custom_call.1} parent=11 // pred_region
        _
      $region20: #{tpu_custom_call.1} parent=11 // pred_fallthru
        _
      // Predicated region
      $region21: #{tpu_custom_call.1} parent=11 // pred_check
        %p168 = pneg %p126
      $region22: #{tpu_custom_call.1} parent=11 // pred_check_branch
        %170 = sbr.rel (%p168) target = $region24
      $region23: #{tpu_custom_call.1} parent=11 // pred_region
        _
      $region24: #{tpu_custom_call.1} parent=11 // pred_fallthru
        _
    $region12: #{tpu_custom_call.1} parent=5 // pred_fallthru
      _
    %p171 = scmp.lt.s32.totalorder %s11, 2
    // Predicated region
    $region25: #{tpu_custom_call.1} parent=5 // pred_check
      %p172 = pneg %p171
    $region26: #{tpu_custom_call.1} parent=5 // pred_check_branch
      %174 = sbr.rel (%p172) target = $region28
    $region27: #{tpu_custom_call.1} parent=5 // pred_region
      // Predicated region
      $region29: #{tpu_custom_call.1} parent=27 // pred_check
        %p175 = pneg %p31
      $region30: #{tpu_custom_call.1} parent=27 // pred_check_branch
        %177 = sbr.rel (%p175) target = $region32
      $region31: #{tpu_custom_call.1} parent=27 // pred_region
        %p178 = scmp.lt.s32.totalorder %s11, 1
        %s179 = scalar_select %p178, %s11, 1
        %s180 = scalar_lea.vmem %s0, %s179
      $region32: #{tpu_custom_call.1} parent=27 // pred_fallthru
        _
      // Predicated region
      $region33: #{tpu_custom_call.1} parent=27 // pred_check
        %p181 = pneg %p57
      $region34: #{tpu_custom_call.1} parent=27 // pred_check_branch
        %183 = sbr.rel (%p181) target = $region36
      $region35: #{tpu_custom_call.1} parent=27 // pred_region
        %p184 = scmp.lt.s32.totalorder %s11, 1
        %s185 = scalar_select %p184, %s11, 1
        %s186 = smul.addr %s185, 7
        %s187 = smul.addr %s186, 8
        %s188 = scalar_lea.vmem %s1, %s187
      $region36: #{tpu_custom_call.1} parent=27 // pred_fallthru
        _
    $region28: #{tpu_custom_call.1} parent=5 // pred_fallthru
      _
    %p189 = scmp.le.s32.totalorder 1, %s11
    %p190 = scmp.lt.s32.totalorder %s11, 3
    %p191 = pnand %p189, %p190
    %p192 = pneg %p191
    // Predicated region
    $region37: #{tpu_custom_call.1} parent=5 // pred_check
      _
    $region38: #{tpu_custom_call.1} parent=5 // pred_check_branch
      %194 = sbr.rel (%p191) target = $region40
    $region39: #{tpu_custom_call.1} parent=5 // pred_region
      %s195 = ssub.s32 %s11, 1
      %p196 = scmp.lt.s32.totalorder %s16, 1
      %s197 = scalar_select %p196, %s16, 1
      %s198 = scalar_lea.vmem %s0, %s197
      %p199 = pneg %p37
      %p200 = pneg %p34
      %p201 = scmp.lt.s32.totalorder %s16, 1
      %s202 = scalar_select %p201, %s16, 1
      %s203 = smul.addr %s202, 7
      %s204 = smul.addr %s203, 8
      %s205 = scalar_lea.vmem %s1, %s204
      %p206 = pneg %p63
      %p207 = pneg %p60
      %p208 = pneg %p84
      %p209 = pneg %p81
      %p210 = pneg %p105
      %p211 = pneg %p102
      %p212 = pneg %p126
      %p213 = pneg %p123
      %p214 = pneg %p147
      %p215 = pneg %p144
      %p216 = scmp.lt.s32.totalorder %s16, 1
      %s217 = scalar_select %p216, %s16, 1
      %s218 = scalar_lea.vmem %s0, %s217
      %p219 = scmp.lt.s32.totalorder %s16, 1
      %s220 = scalar_select %p219, %s16, 1
      %s221 = smul.addr %s220, 7
      %s222 = smul.addr %s221, 8
      %s223 = scalar_lea.vmem %s1, %s222
      %p225 = scmp.eq.s32.totalorder %s16, 0
      // Predicated region
      $region41: #{tpu_custom_call.1} parent=39 // pred_check
        %p226 = pneg %p225
      $region42: #{tpu_custom_call.1} parent=39 // pred_check_branch
        %228 = sbr.rel (%p226) target = $region44
      $region43: #{tpu_custom_call.1} parent=39 // pred_region
        %vm229 = vcmask 253952
        %230 = vst.msk [vmem:[#allocation2] sm:$0x1] %vm229, 0.0
        %231 = vst.msk [vmem:[#allocation3] sm:$0x1] %vm229, 0.0
      $region44: #{tpu_custom_call.1} parent=39 // pred_fallthru
        _
      %v232 = vld [vmem:[%s218] sm:$0x1]
      %v233 = vxor.u32 %v232, 2147483648
      %v234 = vmul.f32 %v233, 1.442695
      %v235 = vpow.pop %v234
      %v236 = vadd.f32 %v235, 1.0
      %v237 = vrcp.pop %v236
      %v238 = vmul.f32 1.0, %v237
      %v239 = vld [vmem:[%s223] sm:$0xff]
      %v240 = vld [vmem:[%s223 + $0x8] sm:$0xff]
      %v241 = vld [vmem:[%s223 + $0x10] sm:$0xff]
      %v242 = vld [vmem:[%s223 + $0x18] sm:$0xff]
      %v243 = vld [vmem:[%s223 + $0x20] sm:$0xff]
      %v244 = vld [vmem:[%s223 + $0x28] sm:$0xff]
      %v245 = vld [vmem:[%s223 + $0x30] sm:$0x1]
      %v247 = vlaneseq
      %v248 = vshrl.u32 %v247, 7
      %v249 = vsub.s32 0, %v248
      %v250 = vrot.slane %v238, %v249
      %v252 = vmul.f32 %v239, %v250
      %v253 = vmul.f32 %v240, %v250
      %v254 = vmul.f32 %v241, %v250
      %v255 = vmul.f32 %v242, %v250
      %v256 = vmul.f32 %v243, %v250
      %v257 = vmul.f32 %v244, %v250
      %v258 = vmul.f32 %v245, %v250
      %v259 = vpack.c.bf16 %v253, %v252
      %v260 = vpack.c.bf16 %v255, %v254
      %v261 = vpack.c.bf16 %v257, %v256
      %v262 = vpack.c.bf16 %v258, %v258
      %v263 = vld [vmem:[%s2] sm:$0xf]
      %v264 = vld [vmem:[%s2 + $0x4] sm:$0xf]
      %v265 = vld [vmem:[%s2 + $0x8] sm:$0xf]
      %v266 = vld [vmem:[%s2 + $0xc] sm:$0xf]
      %v267 = vld [vmem:[%s2 + $0x10] sm:$0xf]
      %v268 = vld [vmem:[%s2 + $0x14] sm:$0xf]
      %v269 = vld [vmem:[%s2 + $0x18] sm:$0xf]
      %v270 = vld [vmem:[%s2 + $0x1c] sm:$0xf]
      %v279 = vunpack.c.l.b16 %v263
      %v280 = vunpack.c.l.b16 %v264
      %v281 = vunpack.c.l.b16 %v265
      %v282 = vunpack.c.l.b16 %v266
      %v283 = vunpack.c.l.b16 %v267
      %v284 = vunpack.c.l.b16 %v268
      %v285 = vunpack.c.l.b16 %v269
      %v286 = vunpack.c.l.b16 %v270
      %v287 = vpack.c.b16 %v280, %v279
      %v288 = vpack.c.b16 %v282, %v281
      %v289 = vpack.c.b16 %v284, %v283
      %v290 = vpack.c.b16 %v286, %v285
      %vm295 = vcmask 523264
      %v297 = vsel %vm295, %v259, 0
      %v300 = vsel %vm295, %v260, 0
      %v303 = vsel %vm295, %v261, 0
      %v306 = vsel %vm295, %v262, 0
      %308 = vmatprep.subr.bf16.mxu0 0
      %309 = vmatpush1.bf16.msra.mxu0 %v287
      %310 = vmatprep.subr.bf16.mxu0 0
      %311 = vmatpush1.bf16.msra.mxu0 %v288
      %312 = vmatprep.subr.bf16.mxu0 0
      %313 = vmatpush1.bf16.msra.mxu0 %v289
      %314 = vmatprep.subr.bf16.mxu0 0
      %315 = vmatpush1.bf16.msra.mxu0 %v290
      %316 = vmatprep.subr.bf16.mxu0 0
      %317 = vmatpush1.bf16.msra.mxu0 0
      %318 = vmatprep.subr.bf16.mxu0 0
      %319 = vmatpush1.bf16.msra.mxu0 0
      %320 = vmatprep.subr.bf16.mxu0 0
      %321 = vmatpush1.bf16.msra.mxu0 0
      %322 = vmatprep.subr.bf16.mxu0 0
      %323 = vmatpush1.bf16.msra.mxu0 0
      %324 = vmatprep.subr.bf16.mxu0 0
      %325 = vmatpush1.bf16.msra.mxu0 0
      %326 = vmatprep.subr.bf16.mxu0 0
      %327 = vmatpush1.bf16.msra.mxu0 0
      %328 = vmatprep.subr.bf16.mxu0 0
      %329 = vmatpush1.bf16.msra.mxu0 0
      %330 = vmatprep.subr.bf16.mxu0 0
      %331 = vmatpush1.bf16.msra.mxu0 0
      %332 = vmatprep.subr.bf16.mxu0 0
      %333 = vmatpush1.bf16.msra.mxu0 0
      %334 = vmatprep.subr.bf16.mxu0 0
      %335 = vmatpush1.bf16.msra.mxu0 0
      %336 = vmatprep.subr.bf16.mxu0 0
      %337 = vmatpush1.bf16.msra.mxu0 0
      %338 = vmatprep.subr.bf16.mxu0 0
      %339 = vmatpush1.bf16.msra.mxu0 0
      %340 = vmatprep.mubr.bf16.mxu0 0
      %341 = vmatmul.mubr.bf16.gmra.mrb[0].mxu0 %v297
      %v342 = vpop.f32.mrb[0].mxu0
      %v343 = vadd.f32 0.0, %v342
      %v344 = vpop.f32.mrb[0].mxu0
      %v345 = vpop.f32.mrb[0].mxu0
      %v346 = vadd.f32 0.0, %v345
      %v347 = vpop.f32.mrb[0].mxu0
      %348 = vmatprep.mubr.bf16.mxu0 0
      %349 = vmatmul.mubr.bf16.gmra.mrb[0].mxu0 %v300
      %v350 = vpop.f32.mrb[0].mxu0
      %v351 = vadd.f32 0.0, %v350
      %v352 = vpop.f32.mrb[0].mxu0
      %v353 = vpop.f32.mrb[0].mxu0
      %v354 = vadd.f32 0.0, %v353
      %v355 = vpop.f32.mrb[0].mxu0
      %356 = vmatprep.mubr.bf16.mxu0 0
      %357 = vmatmul.mubr.bf16.gmra.mrb[0].mxu0 %v303
      %v358 = vpop.f32.mrb[0].mxu0
      %v359 = vadd.f32 0.0, %v358
      %v360 = vpop.f32.mrb[0].mxu0
      %v361 = vpop.f32.mrb[0].mxu0
      %v362 = vadd.f32 0.0, %v361
      %v363 = vpop.f32.mrb[0].mxu0
      %364 = vmatprep.mubr.bf16.mxu0 0
      %365 = vmatmul.mubr.bf16.gmra.mrb[0].mxu0 %v306
      %v366 = vpop.f32.mrb[0].mxu0
      %v367 = vadd.f32 0.0, %v366
      %v368 = vpop.f32.mrb[0].mxu0
      %v369 = vpop.f32.mrb[0].mxu0
      %v370 = vpop.f32.mrb[0].mxu0
      %371 = vdwg.mxu0
      %s372 = smul.u32 %s16, 56
      %s373 = scalar_lea.vmem %s5, %s372
      %vm374 = vcmask 261120
      %375 = vst.msk [vmem:[%s373] sm:$0xff] %vm374, %v343
      %376 = vst.msk [vmem:[%s373 + $0x8] sm:$0xff] %vm374, %v346
      %377 = vst.msk [vmem:[%s373 + $0x10] sm:$0xff] %vm374, %v351
      %378 = vst.msk [vmem:[%s373 + $0x18] sm:$0xff] %vm374, %v354
      %379 = vst.msk [vmem:[%s373 + $0x20] sm:$0xff] %vm374, %v359
      %380 = vst.msk [vmem:[%s373 + $0x28] sm:$0xff] %vm374, %v362
      %vm381 = vcmask 253952
      %382 = vst.msk [vmem:[%s373 + $0x30] sm:$0x1] %vm381, %v367
      %v383 = vld [vmem:[#allocation2] sm:$0x1]
      %v384 = vsel %vm374, %v343, 0.0
      %v385 = vsel %vm374, %v346, 0.0
      %v386 = vadd.f32 %v384, %v385
      %v387 = vsel %vm374, %v351, 0.0
      %v388 = vadd.f32 %v386, %v387
      %v389 = vsel %vm374, %v354, 0.0
      %v390 = vadd.f32 %v388, %v389
      %v391 = vsel %vm374, %v359, 0.0
      %v392 = vadd.f32 %v390, %v391
      %v393 = vsel %vm374, %v362, 0.0
      %v394 = vadd.f32 %v392, %v393
      %v395 = vsel %vm381, %v367, 0.0
      %v396 = vadd.f32 %v394, %v395
      %v397 = vrot.slane %v396, 4
      %v398 = vadd.f32 %v396, %v397
      %v399 = vrot.slane %v398, 2
      %v400 = vadd.f32 %v398, %v399
      %v401 = vrot.slane %v400, 1
      %v402 = vadd.f32 %v400, %v401
      %v403 = vadd.f32 %v383, %v402
      %404 = vst.msk [vmem:[#allocation2] sm:$0x1] %vm381, %v403
      %v405 = vld [vmem:[#allocation3] sm:$0x1]
      %v406 = vmul.f32 %v343, %v343
      %v407 = vmul.f32 %v346, %v346
      %v408 = vmul.f32 %v351, %v351
      %v409 = vmul.f32 %v354, %v354
      %v410 = vmul.f32 %v359, %v359
      %v411 = vmul.f32 %v362, %v362
      %v412 = vmul.f32 %v367, %v367
      %v413 = vsel %vm374, %v406, 0.0
      %v414 = vsel %vm374, %v407, 0.0
      %v415 = vadd.f32 %v413, %v414
      %v416 = vsel %vm374, %v408, 0.0
      %v417 = vadd.f32 %v415, %v416
      %v418 = vsel %vm374, %v409, 0.0
      %v419 = vadd.f32 %v417, %v418
      %v420 = vsel %vm374, %v410, 0.0
      %v421 = vadd.f32 %v419, %v420
      %v422 = vsel %vm374, %v411, 0.0
      %v423 = vadd.f32 %v421, %v422
      %v424 = vsel %vm381, %v412, 0.0
      %v425 = vadd.f32 %v423, %v424
      %v426 = vrot.slane %v425, 4
      %v427 = vadd.f32 %v425, %v426
      %v428 = vrot.slane %v427, 2
      %v429 = vadd.f32 %v427, %v428
      %v430 = vrot.slane %v429, 1
      %v431 = vadd.f32 %v429, %v430
      %v432 = vadd.f32 %v405, %v431
      %433 = vst.msk [vmem:[#allocation3] sm:$0x1] %vm381, %v432
      %p434 = scmp.eq.s32.totalorder %s16, 1
      // Predicated region
      $region45: #{tpu_custom_call.1} parent=39 // pred_check
        %p435 = pneg %p434
      $region46: #{tpu_custom_call.1} parent=39 // pred_check_branch
        %437 = sbr.rel (%p435) target = $region48
      $region47: #{tpu_custom_call.1} parent=39 // pred_region
        %v438 = vld [vmem:[#allocation2] sm:$0x1]
        %v439 = vmul.f32 %v438, 0.010204081
        %v440 = vld [vmem:[#allocation3] sm:$0x1]
        %v441 = vmul.f32 %v440, 0.010204081
        %v442 = vmul.f32 %v439, %v439
        %v443 = vsub.f32 %v441, %v442
        %v444 = vld [vmem:[%s3] sm:$0x1]
        %v445 = vadd.f32 %v443, 1e-05
        %v446 = vrsqrt.pop %v445
        %v447 = vmul.f32 %v444, %v446
        %v448 = vld [vmem:[%s4] sm:$0x1]
        %v449 = vmul.f32 %v439, %v447
        %v450 = vsub.f32 %v448, %v449
        %v451 = vld [vmem:[%s5] sm:$0xff]
        %v452 = vld [vmem:[%s5 + $0x8] sm:$0xff]
        %v453 = vld [vmem:[%s5 + $0x10] sm:$0xff]
        %v454 = vld [vmem:[%s5 + $0x18] sm:$0xff]
        %v455 = vld [vmem:[%s5 + $0x20] sm:$0xff]
        %v456 = vld [vmem:[%s5 + $0x28] sm:$0xff]
        %v457 = vld [vmem:[%s5 + $0x30] sm:$0x1]
        %v458 = vld [vmem:[%s5 + $0x38] sm:$0xff]
        %v459 = vld [vmem:[%s5 + $0x40] sm:$0xff]
        %v460 = vld [vmem:[%s5 + $0x48] sm:$0xff]
        %v461 = vld [vmem:[%s5 + $0x50] sm:$0xff]
        %v462 = vld [vmem:[%s5 + $0x58] sm:$0xff]
        %v463 = vld [vmem:[%s5 + $0x60] sm:$0xff]
        %v464 = vld [vmem:[%s5 + $0x68] sm:$0x1]
        %v466 = vlaneseq
        %v467 = vshrl.u32 %v466, 7
        %v468 = vsub.s32 0, %v467
        %v469 = vrot.slane %v447, %v468
        %v471 = vmul.f32 %v451, %v469
        %v472 = vmul.f32 %v452, %v469
        %v473 = vmul.f32 %v453, %v469
        %v474 = vmul.f32 %v454, %v469
        %v475 = vmul.f32 %v455, %v469
        %v476 = vmul.f32 %v456, %v469
        %v477 = vmul.f32 %v457, %v469
        %v478 = vmul.f32 %v458, %v469
        %v479 = vmul.f32 %v459, %v469
        %v480 = vmul.f32 %v460, %v469
        %v481 = vmul.f32 %v461, %v469
        %v482 = vmul.f32 %v462, %v469
        %v483 = vmul.f32 %v463, %v469
        %v484 = vmul.f32 %v464, %v469
        %v486 = vlaneseq
        %v487 = vshrl.u32 %v486, 7
        %v488 = vsub.s32 0, %v487
        %v489 = vrot.slane %v450, %v488
        %v491 = vadd.f32 %v471, %v489
        %v492 = vadd.f32 %v472, %v489
        %v493 = vadd.f32 %v473, %v489
        %v494 = vadd.f32 %v474, %v489
        %v495 = vadd.f32 %v475, %v489
        %v496 = vadd.f32 %v476, %v489
        %v497 = vadd.f32 %v477, %v489
        %v498 = vadd.f32 %v478, %v489
        %v499 = vadd.f32 %v479, %v489
        %v500 = vadd.f32 %v480, %v489
        %v501 = vadd.f32 %v481, %v489
        %v502 = vadd.f32 %v482, %v489
        %v503 = vadd.f32 %v483, %v489
        %v504 = vadd.f32 %v484, %v489
        %505 = vst.msk [vmem:[%s5] sm:$0xff] %vm374, %v491
        %506 = vst.msk [vmem:[%s5 + $0x8] sm:$0xff] %vm374, %v492
        %507 = vst.msk [vmem:[%s5 + $0x10] sm:$0xff] %vm374, %v493
        %508 = vst.msk [vmem:[%s5 + $0x18] sm:$0xff] %vm374, %v494
        %509 = vst.msk [vmem:[%s5 + $0x20] sm:$0xff] %vm374, %v495
        %510 = vst.msk [vmem:[%s5 + $0x28] sm:$0xff] %vm374, %v496
        %511 = vst.msk [vmem:[%s5 + $0x30] sm:$0x1] %vm381, %v497
        %512 = vst.msk [vmem:[%s5 + $0x38] sm:$0xff] %vm374, %v498
        %513 = vst.msk [vmem:[%s5 + $0x40] sm:$0xff] %vm374, %v499
        %514 = vst.msk [vmem:[%s5 + $0x48] sm:$0xff] %vm374, %v500
        %515 = vst.msk [vmem:[%s5 + $0x50] sm:$0xff] %vm374, %v501
        %516 = vst.msk [vmem:[%s5 + $0x58] sm:$0xff] %vm374, %v502
        %517 = vst.msk [vmem:[%s5 + $0x60] sm:$0xff] %vm374, %v503
        %518 = vst.msk [vmem:[%s5 + $0x68] sm:$0x1] %vm381, %v504
      $region48: #{tpu_custom_call.1} parent=39 // pred_fallthru
        _
      // Predicated region
      $region49: #{tpu_custom_call.1} parent=39 // pred_check
        %p519 = pneg %p144
      $region50: #{tpu_custom_call.1} parent=39 // pred_check_branch
        %521 = sbr.rel (%p519) target = $region52
      $region51: #{tpu_custom_call.1} parent=39 // pred_region
        _
      $region52: #{tpu_custom_call.1} parent=39 // pred_fallthru
        _
      // Predicated region
      $region53: #{tpu_custom_call.1} parent=39 // pred_check
        %p522 = pneg %p144
      $region54: #{tpu_custom_call.1} parent=39 // pred_check_branch
        %524 = sbr.rel (%p522) target = $region56
      $region55: #{tpu_custom_call.1} parent=39 // pred_region
        _
      $region56: #{tpu_custom_call.1} parent=39 // pred_fallthru
        _
    $region40: #{tpu_custom_call.1} parent=5 // pred_fallthru
      _
    %p525 = scmp.le.s32.totalorder 2, %s11
    // Predicated region
    $region57: #{tpu_custom_call.1} parent=5 // pred_check
      %p526 = pneg %p525
    $region58: #{tpu_custom_call.1} parent=5 // pred_check_branch
      %528 = sbr.rel (%p526) target = $region60
    $region59: #{tpu_custom_call.1} parent=5 // pred_region
      %s529 = ssub.s32 %s11, 2
    $region60: #{tpu_custom_call.1} parent=5 // pred_fallthru
      _
  $region6: #{tpu_custom_call.1} parent=0 // loop_footer
    %s15 = sadd.s32 1, %s11
  $region7: #{tpu_custom_call.1} parent=0 // loop_footer_branch
    %10 = sbr.rel target = $region3
  $region8: #{tpu_custom_call.1} parent=0 // loop_exit
    _

</llo_original>
